<compile_context>
chip_gen: v5e
topology: v5e:2x2
jax: 0.10.0
libtpu: 0.0.40
codegen_flags: <defaults>
</compile_context>

<pallas_src>
import jax
import jax.numpy as jnp
from jax import lax
from jax.experimental import pallas as pl
from jax.experimental.pallas import tpu as pltpu


def attention_kernel(rnn_ref, h_ref, w_ref, b_ref, out_ref):
    # rnn_ref: (S, B_blk, H)  native PyTorch (seq, batch, hidden) layout block
    # h_ref:   (B_blk, H)     final hidden state block
    # w_ref:   (H_out, H_in)  PyTorch Linear weight layout
    # b_ref:   (1, H)         Linear bias (always f32)
    # out_ref: (B_blk, S)     lane-dense attention weights (f32)
    S, B_blk, H = rnn_ref.shape

    # Fold (seq, batch_block) into one M dimension for a single MXU matmul.
    # B_blk is a multiple of 8 whenever B allows (see _pick_batch_block), so
    # this fold does not force a sublane relayout for real workloads.
    x = rnn_ref[...].reshape(S * B_blk, H)                       # (M, H_in)

    # Linear: x @ W^T + b  -- contract W on its input dim (dim 1); operands may
    # be f32 or bf16, accumulation is always f32 on the MXU.
    xw = lax.dot_general(
        x, w_ref[...],
        dimension_numbers=(((1,), (1,)), ((), ())),
        preferred_element_type=jnp.float32,
    )                                                            # (M, H_out) f32
    a = jnp.tanh(xw + b_ref[...].astype(jnp.float32))            # (M, H) f32
    a = a.reshape(S, B_blk, H)                                   # (S, B_blk, H)

    # scores[s, b] = <a[s, b, :], h[b, :]>  -- VPU multiply + lane-axis reduce,
    # kept in f32 (v5e has no bf16 VPU/EUP).
    h = h_ref[...].astype(jnp.float32)
    scores_sb = jnp.sum(a * h[None, :, :], axis=-1)              # (S, B_blk)

    # Lane-dense (B_blk, S) scores: softmax over the sequence runs on the lane
    # axis and the output store is a dense (B_blk, S) slab.  (The transpose and
    # lane reduce run on XLU slots and are hidden under the HBM-bound path.)
    scores = scores_sb.T                                         # (B_blk, S)
    m = jnp.max(scores, axis=-1, keepdims=True)
    e = jnp.exp(scores - m)
    p = e / jnp.sum(e, axis=-1, keepdims=True)                   # (B_blk, S)
    out_ref[...] = p.astype(out_ref.dtype)


def _pick_batch_block(S, B, H, elem_bytes, budget_bytes):
    """Largest batch block whose double-buffered VMEM footprint fits the budget.

    The kernel is HBM-bandwidth bound, so the policy is "biggest tile that fits
    VMEM" (measured ~29% of HBM roofline at tiny tiles vs ~85% at large ones),
    not "smallest tile that fills the MXU".  Blocks are multiples of 8 (or the
    full batch) to satisfy the (8, 128) tiling rule, and we prefer keeping at
    least 2 grid steps so the `parallel` axis can shard across v7x's 2 TCs.
    """
    def footprint(d):
        rnn = S * d * H * elem_bytes            # activation tile (dominant)
        hst = d * H * elem_bytes                # final hidden state tile
        out = d * S * 4                         # f32 output tile
        const = H * H * elem_bytes + H * 4      # weight + bias (grid-invariant)
        return 2 * (rnn + hst + out) + const    # 2x: double-buffered pipeline

    cand = sorted({d for d in range(8, B + 1, 8) if B % d == 0} | {B})
    fitting = [d for d in cand if footprint(d) <= budget_bytes]
    if not fitting:
        # Smallest legal block; vmem_limit_bytes below gives extra headroom.
        return cand[0]
    multi_step = [d for d in fitting if B // d >= 2]   # keep both v7x TCs busy
    return max(multi_step) if multi_step else max(fitting)


def attention_forward(rnn_outputs, final_hidden_state, weight, bias,
                      *, vmem_budget_bytes=32 << 20,
                      vmem_limit_bytes=48 << 20):
    """rnn_outputs: (S, B, H) native PyTorch layout (no wrapper transpose);
    final_hidden_state: (B, H); weight: (H_out, H_in) PyTorch Linear layout;
    bias: (H,).

    Pass f32 or bf16 activations/weights; accumulation and softmax stay f32.
    The 32 MiB tile budget + 48 MiB vmem limit are sized for the smallest-VMEM
    generation (v7x: 64 MiB physical / 32 MiB scoped default) and also lift
    v5e/v6e above their scoped defaults (16 / 32 MiB).
    """
    S, B, H = rnn_outputs.shape
    elem_bytes = jnp.dtype(rnn_outputs.dtype).itemsize
    B_blk = _pick_batch_block(S, B, H, elem_bytes, vmem_budget_bytes)
    b2 = bias.reshape(1, H).astype(jnp.float32)
    w = weight.astype(rnn_outputs.dtype)   # tiny (H,H) cast; MXU-matched dtype

    # TODO(synk): for production shapes where S is not a multiple of 128, pad
    # the seq dim in the wrapper so the (B_blk, S) store is an unmasked vst.
    return pl.pallas_call(
        attention_kernel,
        out_shape=jax.ShapeDtypeStruct((B, S), jnp.float32),
        grid=(B // B_blk,),
        in_specs=[
            # Native (S, B, H): block over the batch (middle) dim only.
            pl.BlockSpec((S, B_blk, H), lambda i: (0, i, 0)),
            pl.BlockSpec((B_blk, H), lambda i: (i, 0)),
            # Weight / bias are grid-invariant (constant index_map).
            pl.BlockSpec((H, H), lambda i: (0, 0)),
            pl.BlockSpec((1, H), lambda i: (0, 0)),
        ],
        out_specs=pl.BlockSpec((B_blk, S), lambda i: (i, 0)),
        compiler_params=pltpu.CompilerParams(
            # Batch-block axis is independent -> shard across TCs (v7x megacore).
            dimension_semantics=("parallel",),
            vmem_limit_bytes=vmem_limit_bytes,
        ),
    )(rnn_outputs, final_hidden_state, w, b2)


def attention_reference(rnn_outputs, final_hidden_state, weight, bias):
    x = jnp.transpose(rnn_outputs, (1, 0, 2)).astype(jnp.float32)   # (B, S, H)
    a = jnp.tanh(jnp.einsum("bsh,oh->bso", x, weight.astype(jnp.float32)) + bias)
    scores = jnp.einsum("bsh,bh->bs", a,
                        final_hidden_state.astype(jnp.float32))
    return jax.nn.softmax(scores, axis=1)


if __name__ == "__main__":
    # Small shapes consistent with the module: hidden_dim=16 -> H=32
    hidden_dim = 16
    H = hidden_dim * 2
    S, B = 8, 2

    key = jax.random.PRNGKey(0)
    k1, k2, k3, k4 = jax.random.split(key, 4)

    rnn_outputs = jax.random.normal(k1, (S, B, H), dtype=jnp.float32)
    final_hidden_state = jax.random.normal(k2, (B, H), dtype=jnp.float32)

    # Deterministic Linear(H, H) parameter init (PyTorch-style uniform bound)
    bound = 1.0 / jnp.sqrt(H)
    weight = jax.random.uniform(k3, (H, H), minval=-bound, maxval=bound,
                                dtype=jnp.float32)
    bias = jax.random.uniform(k4, (H,), minval=-bound, maxval=bound,
                              dtype=jnp.float32)

    ref = attention_reference(rnn_outputs, final_hidden_state, weight, bias)

    # f32 path: strict reference check.
    out = attention_forward(rnn_outputs, final_hidden_state, weight, bias)
    out = jax.block_until_ready(out)
    assert out.shape == (B, S)
    assert jnp.allclose(out, ref, atol=1e-5, rtol=1e-5), "f32 mismatch vs reference"

    # bf16 activation path (halves the dominant HBM read on v6e/v7x); the
    # kernel keeps f32 accumulation / softmax, so only a loose tolerance holds.
    out_bf16 = attention_forward(
        rnn_outputs.astype(jnp.bfloat16),
        final_hidden_state.astype(jnp.bfloat16),
        weight.astype(jnp.bfloat16),
        bias,
    )
    out_bf16 = jax.block_until_ready(out_bf16)
    assert out_bf16.shape == (B, S)
    assert jnp.allclose(out_bf16, ref, atol=5e-2, rtol=5e-2), \
        "bf16 mismatch vs reference"

    print("KERNEL_OK")
</pallas_src>

<mosaic_0001>
module attributes {stable_mosaic.version = 11 : i64} {
  func.func @attention_kernel(%arg0: i32, %arg1: memref<8x2x32xf32, #tpu.memory_space<vmem>>, %arg2: memref<2x32xf32, #tpu.memory_space<vmem>>, %arg3: memref<32x32xf32, #tpu.memory_space<vmem>>, %arg4: memref<1x32xf32, #tpu.memory_space<vmem>>, %arg5: memref<2x8xf32, #tpu.memory_space<vmem>>) attributes {dimension_semantics = [#tpu.dimension_semantics<parallel>], iteration_bounds = array<i64: 1>, scalar_prefetch = 0 : i64, scratch_operands = 0 : i64, tpu.core_type = #tpu.core_type<tc>, window_params = [{transform_indices = @transform_0, window_bounds = array<i64: 8, 2, 32>}, {transform_indices = @transform_1, window_bounds = array<i64: 2, 32>}, {pipeline_mode = #tpu.pipeline_mode<synchronous>, transform_indices = @transform_2, window_bounds = array<i64: 32, 32>}, {pipeline_mode = #tpu.pipeline_mode<synchronous>, transform_indices = @transform_3, window_bounds = array<i64: 1, 32>}, {transform_indices = @transform_4, window_bounds = array<i64: 2, 8>}]} {
    %c0 = arith.constant 0 : index
    %c0_0 = arith.constant 0 : index
    %c0_1 = arith.constant 0 : index
    %0 = vector.load %arg1[%c0, %c0_0, %c0_1] : memref<8x2x32xf32, #tpu.memory_space<vmem>>, vector<8x2x32xf32>
    %1 = vector.shape_cast %0 : vector<8x2x32xf32> to vector<16x32xf32>
    %c0_2 = arith.constant 0 : index
    %c0_3 = arith.constant 0 : index
    %2 = vector.load %arg3[%c0_2, %c0_3] : memref<32x32xf32, #tpu.memory_space<vmem>>, vector<32x32xf32>
    %cst = arith.constant dense<0.000000e+00> : vector<16x32xf32>
    %3 = tpu.matmul %1, %2, %cst {dimension_numbers = #tpu.dot_dimension_numbers<[1], [1], [0], [0], [0, 0, 1, 0], [], []>} : vector<16x32xf32>, vector<32x32xf32>, vector<16x32xf32> -> vector<16x32xf32>
    %c0_4 = arith.constant 0 : index
    %c0_5 = arith.constant 0 : index
    %4 = vector.load %arg4[%c0_4, %c0_5] : memref<1x32xf32, #tpu.memory_space<vmem>>, vector<1x32xf32>
    %5 = vector.broadcast %4 : vector<1x32xf32> to vector<16x32xf32>
    %6 = arith.addf %3, %5 : vector<16x32xf32>
    %7 = math.tanh %6 : vector<16x32xf32>
    %8 = vector.shape_cast %7 : vector<16x32xf32> to vector<8x2x32xf32>
    %c0_6 = arith.constant 0 : index
    %c0_7 = arith.constant 0 : index
    %9 = vector.load %arg2[%c0_6, %c0_7] : memref<2x32xf32, #tpu.memory_space<vmem>>, vector<2x32xf32>
    %10 = vector.shape_cast %9 : vector<2x32xf32> to vector<1x2x32xf32>
    %11 = vector.broadcast %10 : vector<1x2x32xf32> to vector<8x2x32xf32>
    %12 = arith.mulf %8, %11 : vector<8x2x32xf32>
    %cst_8 = arith.constant dense<0.000000e+00> : vector<8x2xf32>
    %13 = vector.multi_reduction <add>, %12, %cst_8 [2] : vector<8x2x32xf32> to vector<8x2xf32>
    %14 = tpu.transpose %13, [1, 0] : vector<8x2xf32> -> vector<2x8xf32>
    %cst_9 = arith.constant dense<0xFF800000> : vector<2xf32>
    %15 = vector.multi_reduction <maximumf>, %14, %cst_9 [1] : vector<2x8xf32> to vector<2xf32>
    %16 = vector.shape_cast %15 : vector<2xf32> to vector<2x1xf32>
    %17 = vector.broadcast %16 : vector<2x1xf32> to vector<2x8xf32>
    %18 = arith.subf %14, %17 : vector<2x8xf32>
    %19 = math.exp %18 : vector<2x8xf32>
    %cst_10 = arith.constant dense<0.000000e+00> : vector<2xf32>
    %20 = vector.multi_reduction <add>, %19, %cst_10 [1] : vector<2x8xf32> to vector<2xf32>
    %21 = vector.shape_cast %20 : vector<2xf32> to vector<2x1xf32>
    %22 = vector.broadcast %21 : vector<2x1xf32> to vector<2x8xf32>
    %23 = arith.divf %19, %22 : vector<2x8xf32>
    %c0_11 = arith.constant 0 : index
    %c0_12 = arith.constant 0 : index
    %24 = vector.load %arg5[%c0_11, %c0_12] : memref<2x8xf32, #tpu.memory_space<vmem>>, vector<2x8xf32>
    tpu.vector_store %arg5[%c0_11, %c0_12], %23 {strides = array<i32>} : memref<2x8xf32, #tpu.memory_space<vmem>>, vector<2x8xf32>,
    return
  }
  func.func @transform_0(%arg0: i32) -> (i32, i32, i32) {
    %c0_i32 = arith.constant 0 : i32
    %c0_i32_0 = arith.constant 0 : i32
    %c0_i32_1 = arith.constant 0 : i32
    return %c0_i32, %arg0, %c0_i32_0 : i32, i32, i32
  }
  func.func @transform_1(%arg0: i32) -> (i32, i32) {
    %c0_i32 = arith.constant 0 : i32
    %c0_i32_0 = arith.constant 0 : i32
    return %arg0, %c0_i32 : i32, i32
  }
  func.func @transform_2(%arg0: i32) -> (i32, i32) {
    %c0_i32 = arith.constant 0 : i32
    %c0_i32_0 = arith.constant 0 : i32
    %c0_i32_1 = arith.constant 0 : i32
    return %c0_i32, %c0_i32_0 : i32, i32
  }
  func.func @transform_3(%arg0: i32) -> (i32, i32) {
    %c0_i32 = arith.constant 0 : i32
    %c0_i32_0 = arith.constant 0 : i32
    %c0_i32_1 = arith.constant 0 : i32
    return %c0_i32, %c0_i32_0 : i32, i32
  }
  func.func @transform_4(%arg0: i32) -> (i32, i32) {
    %c0_i32 = arith.constant 0 : i32
    %c0_i32_0 = arith.constant 0 : i32
    return %arg0, %c0_i32 : i32, i32
  }
}

</mosaic_0001>

<llo_original>
// kernel: tpu_custom_call.1
$region0: #{tpu_custom_call.1}
  #allocation0 [shape = 'u32[]', space=smem, size = 0x4, offset = 0x4, fixed_abs, tag = 'smem constant byte address 0x4 - core index']
  #allocation1 [shape = 'u32[72,128]{1,0:T(1,128)}', space=vmem, size = 0x9000, scoped, tag = 'internal scratch']
  %s0 = inlined_call_operand.hbm [shape: f32[8,2,32], index: 0, kind: input, shape index: {}]
  %s1 = inlined_call_operand.hbm [shape: f32[2,32], index: 1, kind: input, shape index: {}]
  %s2 = inlined_call_operand.hbm [shape: f32[32,32], index: 2, kind: input, shape index: {}]
  %s3 = inlined_call_operand.vmem [shape: f32[1,32], index: 3, kind: input, shape index: {}]
  %s4 = inlined_call_operand.hbm [shape: f32[2,8], index: 4, kind: output, shape index: {}]
  %s5 = sld [smem:[#allocation0]]
  $region38: #{tpu_custom_call.1} parent=0
    _
  %s7 = ssub.s32 1, %s5
  %s8 = scalar_select 0, %s7, %s5
  $region1: #{tpu_custom_call.1} parent=0
    #allocation2 [shape = 'u8[8192]{0}', space=vmem, size = 0x2000, scoped, tag = 'input window, operand 0, single buffered']
    #allocation3 [shape = 's32[1]{0}', space=sflag, size = 0x4, scoped, tag = 'scoped memory for tpu_custom_call.1']
    #allocation4 [shape = 's32[1]{0}', space=sflag, size = 0x4, scoped, tag = 'scoped memory for tpu_custom_call.1']
    #allocation5 [shape = 'u8[1024]{0}', space=vmem, size = 0x400, scoped, tag = 'input window, operand 1, single buffered']
    #allocation6 [shape = 's32[1]{0}', space=sflag, size = 0x4, scoped, tag = 'scoped memory for tpu_custom_call.1']
    #allocation7 [shape = 'u8[16384]{0}', space=vmem, size = 0x4000, scoped, tag = 'input window, operand 2, single buffered']
    #allocation8 [shape = 'u8[1024]{0}', space=vmem, size = 0x400, scoped, tag = 'output window, operand 0, single buffered']
    %9 = vsyncpa [#allocation3], 0
    %10 = vsyncpa [#allocation6], 0
    %11 = vsyncpa [#allocation4], 0
    // Predicated region
    $region2: #{tpu_custom_call.1} parent=1 // pred_check
      _
    $region3: #{tpu_custom_call.1} parent=1 // pred_check_branch
      %13 = sbr.rel (0) target = $region5
    $region4: #{tpu_custom_call.1} parent=1 // pred_region
      %15 = vsyncadd [#allocation3], 0
      %s16 = sshll.u32 %s0, 4
      %s17 = int_to_ptr.hbm [resolvable:$true] %s16
      %s18 = sshll.u32 [#allocation2], 4
      %s19 = int_to_ptr.vmem [resolvable:$true] %s18
      %24 = dma.hbm_to_vmem [thread:$0]  %s17, 256, %s19, [#allocation3], 32, 32, 2
    $region5: #{tpu_custom_call.1} parent=1 // pred_fallthru
      _
    // Predicated region
    $region6: #{tpu_custom_call.1} parent=1 // pred_check
      _
    $region7: #{tpu_custom_call.1} parent=1 // pred_check_branch
      %26 = sbr.rel (0) target = $region9
    $region8: #{tpu_custom_call.1} parent=1 // pred_region
      %28 = vsyncadd [#allocation6], 0
      %s30 = sshll.u32 %s1, 4
      %s31 = int_to_ptr.hbm [resolvable:$true] %s30
      %s32 = sshll.u32 [#allocation5], 4
      %s33 = int_to_ptr.vmem [resolvable:$true] %s32
      %35 = dma.hbm_to_vmem [thread:$0]  %s31, 32, %s33, [#allocation6]
    $region9: #{tpu_custom_call.1} parent=1 // pred_fallthru
      _
    // Predicated region
    $region10: #{tpu_custom_call.1} parent=1 // pred_check
      _
    $region11: #{tpu_custom_call.1} parent=1 // pred_check_branch
      %37 = sbr.rel (0) target = $region13
    $region12: #{tpu_custom_call.1} parent=1 // pred_region
      %39 = vsyncadd [#allocation6], 0
      %s40 = sshll.u32 %s2, 4
      %s41 = int_to_ptr.hbm [resolvable:$true] %s40
      %s42 = sshll.u32 [#allocation7], 4
      %s43 = int_to_ptr.vmem [resolvable:$true] %s42
      %48 = dma.hbm_to_vmem [thread:$0]  %s41, 512, %s43, [#allocation6], 128, 128, 8
    $region13: #{tpu_custom_call.1} parent=1 // pred_fallthru
      _
    // Predicated region
    $region14: #{tpu_custom_call.1} parent=1 // pred_check
      _
    $region15: #{tpu_custom_call.1} parent=1 // pred_check_branch
      %50 = sbr.rel (0) target = $region17
    $region16: #{tpu_custom_call.1} parent=1 // pred_region
      _
    $region17: #{tpu_custom_call.1} parent=1 // pred_fallthru
      _
    // Predicated region
    $region18: #{tpu_custom_call.1} parent=1 // pred_check
      _
    $region19: #{tpu_custom_call.1} parent=1 // pred_check_branch
      %52 = sbr.rel (0) target = $region21
    $region20: #{tpu_custom_call.1} parent=1 // pred_region
      %54 = dma.done [#allocation3], 256
    $region21: #{tpu_custom_call.1} parent=1 // pred_fallthru
      _
    // Predicated region
    $region22: #{tpu_custom_call.1} parent=1 // pred_check
      _
    $region23: #{tpu_custom_call.1} parent=1 // pred_check_branch
      %56 = sbr.rel (0) target = $region25
    $region24: #{tpu_custom_call.1} parent=1 // pred_region
      %58 = dma.done [#allocation6], 32
    $region25: #{tpu_custom_call.1} parent=1 // pred_fallthru
      _
    // Predicated region
    $region26: #{tpu_custom_call.1} parent=1 // pred_check
      _
    $region27: #{tpu_custom_call.1} parent=1 // pred_check_branch
      %60 = sbr.rel (0) target = $region29
    $region28: #{tpu_custom_call.1} parent=1 // pred_region
      %62 = dma.done [#allocation6], 512
    $region29: #{tpu_custom_call.1} parent=1 // pred_fallthru
      _
    %v63 = vld [vmem:[#allocation2] sm:$0x3]
    %v64 = vld [vmem:[#allocation2 + $0x2] sm:$0x3]
    %v65 = vld [vmem:[#allocation2 + $0x4] sm:$0x3]
    %v66 = vld [vmem:[#allocation2 + $0x6] sm:$0x3]
    %v67 = vld [vmem:[#allocation2 + $0x8] sm:$0x3]
    %v68 = vld [vmem:[#allocation2 + $0xa] sm:$0x3]
    %v69 = vld [vmem:[#allocation2 + $0xc] sm:$0x3]
    %v70 = vld [vmem:[#allocation2 + $0xe] sm:$0x3]
    %v71 = vld [vmem:[#allocation7] sm:$0xff]
    %v72 = vld [vmem:[#allocation7 + $0x8] sm:$0xff]
    %v73 = vld [vmem:[#allocation7 + $0x10] sm:$0xff]
    %v74 = vld [vmem:[#allocation7 + $0x18] sm:$0xff]
    %v75 = vld [vmem:[%s3] sm:$0x1]
    %v77 = vperm.slane %v75, 0
    %87 = vst [vmem:[#allocation1] ss:$4 sm:$0xff] %v63
    %s88 = scalar_lea.vmem [#allocation1], 1
    %89 = vst [vmem:[%s88] ss:$4 sm:$0xff] %v64
    %s90 = scalar_lea.vmem [#allocation1], 2
    %91 = vst [vmem:[%s90] ss:$4 sm:$0xff] %v65
    %s92 = scalar_lea.vmem [#allocation1], 3
    %93 = vst [vmem:[%s92] ss:$4 sm:$0xff] %v66
    %s94 = scalar_lea.vmem [#allocation1], 32
    %95 = vst [vmem:[%s94] ss:$4 sm:$0xff] %v67
    %s96 = scalar_lea.vmem [#allocation1], 33
    %97 = vst [vmem:[%s96] ss:$4 sm:$0xff] %v68
    %s98 = scalar_lea.vmem [#allocation1], 34
    %99 = vst [vmem:[%s98] ss:$4 sm:$0xff] %v69
    %s100 = scalar_lea.vmem [#allocation1], 35
    %101 = vst [vmem:[%s100] ss:$4 sm:$0xff] %v70
    %v102 = vld.sshfl [vmem:[#allocation1] sm:$0xff pattern:$0x73625140]
    %v103 = vld.sshfl [vmem:[#allocation1 + $0x20] sm:$0xff pattern:$0x73625140]
    %vm104 = vcmask 261120
    %v105 = vsel %vm104, %v102, 0
    %v107 = vsel %vm104, %v103, 0
    %v110 = vsel %vm104, %v71, 0
    %v113 = vsel %vm104, %v72, 0
    %v116 = vsel %vm104, %v73, 0
    %v119 = vsel %vm104, %v74, 0
    %121 = vmatpush.xpose.msra.mxu0 0.0
    %122 = vmatpush.xpose.msra.mxu0 0.0
    %123 = vmatpush.xpose.msra.mxu0 0.0
    %124 = vmatpush.xpose.msra.mxu0 0.0
    %125 = vmatpush.xpose.msra.mxu0 0.0
    %126 = vmatpush.xpose.msra.mxu0 0.0
    %127 = vmatpush.xpose.msra.mxu0 0.0
    %128 = vmatpush.xpose.msra.mxu0 0.0
    %129 = vmatpush.xpose.msra.mxu0 0.0
    %130 = vmatpush.xpose.msra.mxu0 0.0
    %131 = vmatpush.xpose.msra.mxu0 0.0
    %132 = vmatpush.xpose.msra.mxu0 0.0
    %133 = vmatpush.xpose.msra.mxu0 %v119
    %134 = vmatpush.xpose.msra.mxu0 %v116
    %135 = vmatpush.xpose.msra.mxu0 %v113
    %136 = vmatpush.xpose.msra.mxu0 %v110
    %137 = vmatmul.f32.gmra.mxu0 %v105
    %v138 = vpop.f32.mrf.mxu0
    %v139 = vadd.f32 %v77, %v138
    %140 = vmatmul.f32.gmra.mxu0 %v107
    %v141 = vpop.f32.mrf.mxu0
    %v142 = vadd.f32 %v77, %v141
    %143 = vdwg.mxu0
    %v144 = vtanh.pop %v139
    %v145 = vtanh.pop %v142
    %v148 = vrot.slane %v144, 2
    %v149 = vrot.slane %v144, 4
    %v150 = vrot.slane %v144, 6
    %v151 = vrot.slane %v145, 2
    %v152 = vrot.slane %v145, 4
    %v153 = vrot.slane %v145, 6
    %v160 = vld [vmem:[#allocation5] sm:$0x3]
    %v161 = vmul.f32 %v144, %v160
    %v162 = vmul.f32 %v148, %v160
    %v163 = vmul.f32 %v149, %v160
    %v164 = vmul.f32 %v150, %v160
    %v165 = vmul.f32 %v145, %v160
    %v166 = vmul.f32 %v151, %v160
    %v167 = vmul.f32 %v152, %v160
    %v168 = vmul.f32 %v153, %v160
    %vm169 = vcmask 254976
    %v170 = vsel %vm169, %v161, 0.0
    %171 = vadd.xlane.f32.xlu0 %v170
    %v172 = vpop.xlane.xlu0 %171
    %v173 = vsel %vm169, %v162, 0.0
    %174 = vadd.xlane.f32.xlu0 %v173
    %v175 = vpop.xlane.xlu0 %174
    %v176 = vsel %vm169, %v163, 0.0
    %177 = vadd.xlane.f32.xlu0 %v176
    %v178 = vpop.xlane.xlu0 %177
    %v179 = vsel %vm169, %v164, 0.0
    %180 = vadd.xlane.f32.xlu0 %v179
    %v181 = vpop.xlane.xlu0 %180
    %v182 = vsel %vm169, %v165, 0.0
    %183 = vadd.xlane.f32.xlu0 %v182
    %v184 = vpop.xlane.xlu0 %183
    %v185 = vsel %vm169, %v166, 0.0
    %186 = vadd.xlane.f32.xlu0 %v185
    %v187 = vpop.xlane.xlu0 %186
    %v188 = vsel %vm169, %v167, 0.0
    %189 = vadd.xlane.f32.xlu0 %v188
    %v190 = vpop.xlane.xlu0 %189
    %v191 = vsel %vm169, %v168, 0.0
    %192 = vadd.xlane.f32.xlu0 %v191
    %v193 = vpop.xlane.xlu0 %192
    %v202 = vlaneseq
    %v203 = vand.u32 %v202, 127
    %v204 = vperm.slane %v172, %v203
    %v205 = vperm.slane %v175, %v203
    %v206 = vperm.slane %v178, %v203
    %v207 = vperm.slane %v181, %v203
    %v208 = vperm.slane %v184, %v203
    %v209 = vperm.slane %v187, %v203
    %v210 = vperm.slane %v190, %v203
    %v211 = vperm.slane %v193, %v203
    %vm212 = vcmask 1041409
    %v213 = vsel %vm212, %v205, %v204
    %vm214 = vcmask 1042434
    %v215 = vsel %vm214, %v206, %v213
    %vm216 = vcmask 1043459
    %v217 = vsel %vm216, %v207, %v215
    %vm218 = vcmask 1044484
    %v219 = vsel %vm218, %v208, %v217
    %vm220 = vcmask 1045509
    %v221 = vsel %vm220, %v209, %v219
    %vm222 = vcmask 1046534
    %v223 = vsel %vm222, %v210, %v221
    %vm224 = vcmask 1047559
    %v225 = vsel %vm224, %v211, %v223
    %227 = vxpose.xlu0.b32.start [1/16] %v225, 128
    %228 = vxpose.xlu0.b32.cont [2/16] 0.0, 128
    %229 = vxpose.xlu0.b32.cont [3/16] 0.0, 128
    %230 = vxpose.xlu0.b32.cont [4/16] 0.0, 128
    %231 = vxpose.xlu0.b32.cont [5/16] 0.0, 128
    %232 = vxpose.xlu0.b32.cont [6/16] 0.0, 128
    %233 = vxpose.xlu0.b32.cont [7/16] 0.0, 128
    %234 = vxpose.xlu0.b32.cont [8/16] 0.0, 128
    %235 = vxpose.xlu0.b32.cont [9/16] 0.0, 128
    %236 = vxpose.xlu0.b32.cont [10/16] 0.0, 128
    %237 = vxpose.xlu0.b32.cont [11/16] 0.0, 128
    %238 = vxpose.xlu0.b32.cont [12/16] 0.0, 128
    %239 = vxpose.xlu0.b32.cont [13/16] 0.0, 128
    %240 = vxpose.xlu0.b32.cont [14/16] 0.0, 128
    %241 = vxpose.xlu0.b32.cont [15/16] 0.0, 128
    %242 = vxpose.xlu0.b32.end [16/16] 0.0, 128
    %v243 = vpop.trf.xlu0
    %v244 = vpop.trf.xlu0
    %v245 = vpop.trf.xlu0
    %v246 = vpop.trf.xlu0
    %v247 = vpop.trf.xlu0
    %v248 = vpop.trf.xlu0
    %v249 = vpop.trf.xlu0
    %v250 = vpop.trf.xlu0
    %v251 = vpop.trf.xlu0
    %v252 = vpop.trf.xlu0
    %v253 = vpop.trf.xlu0
    %v254 = vpop.trf.xlu0
    %v255 = vpop.trf.xlu0
    %v256 = vpop.trf.xlu0
    %v257 = vpop.trf.xlu0
    %v258 = vpop.trf.xlu0
    %vm259 = vcmask 58368
    %v260 = vsel %vm259, %v243, -inf
    %261 = vmax.xlane.f32.xlu0 %v260
    %v262 = vpop.xlane.xlu0 %261
    %v263 = vsub.f32 %v243, %v262
    %v264 = vmul.f32 %v263, 1.442695
    %v265 = vpow.pop %v264
    %v266 = vsel %vm259, %v265, 0.0
    %267 = vadd.xlane.f32.xlu0 %v266
    %v268 = vpop.xlane.xlu0 %267
    %v269 = vrcp.pop %v268
    %v270 = vmul.f32 %v268, %v269
    %v271 = vsub.f32 1.0, %v270
    %v272 = vmul.f32 %v269, %v271
    %v273 = vadd.f32 %v269, %v272
    %vm274 = vweird.f32 %v268
    %vm275 = vweird.f32 %v269
    %vm276 = vmor %vm274, %vm275
    %v277 = vsel %vm276, %v269, %v273
    %v278 = vand.u32 2147483647, %v268
    %vm279 = vcmp.eq.f32.partialorder %v278, 8.507059e+37
    %v280 = vand.u32 %v268, 2147483648
    %v281 = vor.u32 1.1754944e-38, %v280
    %v282 = vsel %vm279, %v281, %v277
    %v283 = vmul.f32 %v265, %v282
    %284 = vst.msk [vmem:[#allocation8] sm:$0x3] %vm259, %v283
    // Predicated region
    $region30: #{tpu_custom_call.1} parent=1 // pred_check
      _
    $region31: #{tpu_custom_call.1} parent=1 // pred_check_branch
      %286 = sbr.rel (0) target = $region33
    $region32: #{tpu_custom_call.1} parent=1 // pred_region
      %288 = vsyncadd [#allocation4], 0
      %s290 = sshll.u32 [#allocation8], 4
      %s291 = int_to_ptr.vmem [resolvable:$true] %s290
      %s292 = sshll.u32 %s4, 4
      %s293 = int_to_ptr.hbm [resolvable:$true] %s292
      %295 = dma.vmem_to_hbm [thread:$0]  %s291, 32, %s293, [#allocation4]
    $region33: #{tpu_custom_call.1} parent=1 // pred_fallthru
      _
    // Predicated region
    $region34: #{tpu_custom_call.1} parent=1 // pred_check
      _
    $region35: #{tpu_custom_call.1} parent=1 // pred_check_branch
      %297 = sbr.rel (0) target = $region37
    $region36: #{tpu_custom_call.1} parent=1 // pred_region
      %299 = dma.done [#allocation4], 32
    $region37: #{tpu_custom_call.1} parent=1 // pred_fallthru
      _
    %300 = vsyncpa [#allocation3], 1
    %301 = vsyncpa [#allocation6], 1
    %302 = vsyncpa [#allocation4], 1

</llo_original>
